<compile_context>
chip_gen: v5e
topology: v5e:2x2
jax: 0.10.0
libtpu: 0.0.40
codegen_flags: <defaults>
</compile_context>

<pallas_src>
import functools
import math

import jax
import jax.numpy as jnp
from jax.experimental import pallas as pl
from jax.experimental.pallas import tpu as pltpu


def _sdpa_kernel(k_ref, v_ref, wkq_ref, wv_ref, hexp_ref, wo_ref,
                 out_ref, w_ref, *, scale):
    # k_ref: (TB*L, dim_k)   v_ref: (TB*L, dim_v)
    # wkq_ref: (dim_k, H)        -- pre-folded Wk . Wq
    # wv_ref:  (dim_v, H*DVL)    -- flattened Wv
    # hexp_ref:(H, H*DVL)        -- 0/1 head-broadcast matrix (mm_dtype)
    # wo_ref:  (H*DVL, R)        -- flattened Wo
    # out_ref: (TB, R)           w_ref: (TB, L*H)
    rows = k_ref.shape[0]
    TB = out_ref.shape[0]
    L = rows // TB
    H = wkq_ref.shape[-1]
    HD = wv_ref.shape[-1]                       # H * dim_v_latent

    K2 = k_ref[...]                             # (rows, dim_k)
    V2 = v_ref[...]                             # (rows, dim_v)

    # ---- logits: one MXU matmul with the pre-folded Wk.Wq --------------------
    QK = jnp.dot(K2, wkq_ref[...], preferred_element_type=jnp.float32)   # (rows, H)
    # mask = isnan(K[..., 0]) -> -inf logit for that sequence position.
    mask = jnp.isnan(K2[:, 0:1])                                         # (rows, 1)
    logits = jnp.where(mask, -jnp.inf, scale * QK)

    # ---- softmax over the sequence axis (torch dim=-2) -----------------------
    # NOTE: a batch element whose every position is masked yields NaN weights,
    # matching the reference.
    logits3 = logits.reshape(TB, L, H)
    m = jnp.max(logits3, axis=1, keepdims=True)
    e = jnp.exp(logits3 - m)
    denom = jnp.sum(e, axis=1, keepdims=True)                            # (TB,1,H)
    w3 = e / denom                                                       # exact; denom is tiny
    # lane-dense store: one (TB, L*H) slab instead of TB*L rows of width H.
    w_ref[...] = w3.reshape(TB, L * H).astype(w_ref.dtype)

    # ---- V projection + nanmean over the sequence ----------------------------
    Vp = jnp.dot(V2, wv_ref[...], preferred_element_type=jnp.float32)    # (rows, HD)
    # Any NaN in a V row makes the whole Vp row NaN, and masked softmax rows
    # have w == 0 (0*NaN is still NaN), so a per-row mask derived from V is
    # exactly the reference's finite pattern.
    row_nan = jnp.max(jnp.isnan(V2).astype(jnp.float32),
                      axis=-1, keepdims=True) > 0.0                      # (rows, 1)
    Vp_clean = jnp.where(row_nan, 0.0, Vp)

    # Broadcast per-head weights over the latent dim via a 0/1 matmul (MXU):
    # w_full[n, h*DVL + v] == w[n, h] (up to mm_dtype rounding of w).
    w_flat = w3.reshape(rows, H).astype(hexp_ref.dtype)
    w_full = jnp.dot(w_flat, hexp_ref[...],
                     preferred_element_type=jnp.float32)                 # (rows, HD)

    num = jnp.sum((w_full * Vp_clean).reshape(TB, L, HD), axis=1)        # (TB, HD)
    valid = jnp.sum((1.0 - row_nan.astype(jnp.float32)).reshape(TB, L),
                    axis=1, keepdims=True)                               # (TB, 1)
    qkv = num / valid                                                    # exact; valid is tiny

    # ---- output projection ----------------------------------------------------
    out_ref[...] = jnp.dot(qkv.astype(wo_ref.dtype), wo_ref[...],
                           preferred_element_type=jnp.float32
                           ).astype(out_ref.dtype)                       # (TB, R)


def scaled_dot_product_attention(K, V, Wq, Wk, Wv, Wo, *,
                                 mm_dtype=jnp.bfloat16,
                                 batch_block=None,
                                 target_rows=2048):
    """K: (B, L, dim_k), V: (B, L, dim_v) -> (out (B, R), attn_w (B, L, H))."""
    B, L, dim_k = K.shape
    dim_v = V.shape[-1]
    H, _DKL = Wq.shape
    DVL = Wv.shape[-1]
    HD = H * DVL
    R = Wo.shape[-1]
    scale = 1.0 / math.sqrt(dim_k)          # register_buffer('scale', 1/sqrt(dim_q))

    # --- plain-JAX weight prep (hoisted out of the kernel hot path) -----------
    W_kq = jnp.einsum('dhk,hk->dh', Wk, Wq).astype(mm_dtype)             # (dim_k, H)
    Wv_flat = Wv.reshape(dim_v, HD).astype(mm_dtype)
    Wo_flat = Wo.reshape(HD, R).astype(mm_dtype)
    # 0/1 head-broadcast matrix; entries exactly representable in bf16.
    head_expand = jnp.kron(jnp.eye(H, dtype=jnp.float32),
                           jnp.ones((1, DVL), jnp.float32)).astype(mm_dtype)

    # --- batch blocking: TB batch elements (TB*L MXU rows) per grid step ------
    mm_bytes = jnp.dtype(mm_dtype).itemsize
    # rough per-row VMEM footprint: double-buffered K/V blocks + f32 temps.
    bytes_per_row = (2 * (dim_k + dim_v) * mm_bytes   # K/V blocks (x2 buffers)
                     + 6 * HD * 4                     # Vp / w_full / products
                     + 12 * H * 4)                    # logits / softmax temps
    vmem_budget = 20 * 2**20                          # well under v7x's 64 MiB/TC
    rows_cap = max(8, vmem_budget // max(bytes_per_row, 1))

    if batch_block is not None:
        TB = max(1, min(batch_block, B))
    else:
        TB = max(1, min(B, target_rows // max(L, 1), rows_cap // max(L, 1)))
        if B >= 32:
            TB = min(TB, -(-B // 2))     # keep >= 2 grid steps (v7x megacore)
    TB = -(-TB // 8) * 8                 # sublane-align every block's leading dim

    nb = -(-B // TB)
    B_pad = nb * TB
    rows_blk = TB * L

    K2 = K.reshape(B * L, dim_k).astype(mm_dtype)
    V2 = V.reshape(B * L, dim_v).astype(mm_dtype)
    if B_pad != B:                       # zero-pad tail; padded rows sliced off below
        pad = (B_pad - B) * L
        K2 = jnp.pad(K2, ((0, pad), (0, 0)))
        V2 = jnp.pad(V2, ((0, pad), (0, 0)))

    kernel = functools.partial(_sdpa_kernel, scale=scale)

    out, w_slab = pl.pallas_call(
        kernel,
        out_shape=(
            jax.ShapeDtypeStruct((B_pad, R), jnp.float32),
            jax.ShapeDtypeStruct((B_pad, L * H), jnp.float32),
        ),
        grid_spec=pltpu.PrefetchScalarGridSpec(
            num_scalar_prefetch=0,
            grid=(nb,),
            in_specs=[
                pl.BlockSpec((rows_blk, dim_k), lambda b: (b, 0)),
                pl.BlockSpec((rows_blk, dim_v), lambda b: (b, 0)),
                pl.BlockSpec((dim_k, H), lambda b: (0, 0)),
                pl.BlockSpec((dim_v, HD), lambda b: (0, 0)),
                pl.BlockSpec((H, HD), lambda b: (0, 0)),
                pl.BlockSpec((HD, R), lambda b: (0, 0)),
            ],
            out_specs=(
                pl.BlockSpec((TB, R), lambda b: (b, 0)),
                pl.BlockSpec((TB, L * H), lambda b: (b, 0)),
            ),
        ),
        compiler_params=pltpu.CompilerParams(
            # batch blocks are fully independent -> shard over v7x's 2 TCs
            dimension_semantics=("parallel",),
            # explicit scoped-VMEM limit (v5e default is 16 MiB); 48 MiB is
            # valid on every generation (v7x physical VMEM is 64 MiB/TC).
            vmem_limit_bytes=48 * 2**20,
        ),
    )(K2, V2, W_kq, Wv_flat, head_expand, Wo_flat)

    attn_w = w_slab.reshape(B_pad, L, H)[:B]
    return out[:B], attn_w


def reference(K, V, Wq, Wk, Wv, Wo, scale):
    """Pure-JAX mirror of the PyTorch forward (for validation)."""
    mask = jnp.isnan(K[..., 0])
    Kp = jnp.einsum('...d,dhk->...hk', K, Wk)
    Vp = jnp.einsum('...e,ehv->...hv', V, Wv)
    QK = jnp.einsum('hd,...hd->...h', Wq, Kp)
    QK = jnp.where(mask[..., None], -jnp.inf, QK)
    w = jax.nn.softmax(scale * QK, axis=-2)
    prod = w[..., None] * Vp
    finite = ~jnp.isnan(prod)
    qkv = jnp.sum(jnp.where(finite, prod, 0.0), axis=-3) / jnp.sum(
        finite.astype(jnp.float32), axis=-3)
    out = jnp.einsum('...hv,hvr->...r', qkv, Wo)
    return out, w


if __name__ == "__main__":
    B, L = 2, 8
    dim_k, dim_v, output_size, num_heads = 32, 32, 16, 4
    dim_k_latent = max(1, dim_k // 2)   # 16 (module default)
    dim_v_latent = dim_v                # 32 (module default)

    key = jax.random.PRNGKey(0)
    kk, kv, kq, kwk, kwv, kwo = jax.random.split(key, 6)
    K = jax.random.normal(kk, (B, L, dim_k), jnp.float32)
    V = jax.random.normal(kv, (B, L, dim_v), jnp.float32)
    # Exercise the NaN-mask path (row masked to -inf) and the nanmean path
    # (NaN in V -> that row's V' is NaN and is excluded from the mean).
    K = K.at[0, 3, :].set(jnp.nan)
    V = V.at[1, 5, 2].set(jnp.nan)
    # NOTE: the torch __init__ sets Wq to zeros; deterministic random values
    # are used instead so the QK / softmax path is exercised non-trivially.
    Wq = jax.random.normal(kq, (num_heads, dim_k_latent), jnp.float32) / math.sqrt(dim_k_latent)
    Wk = jax.random.normal(kwk, (dim_k, num_heads, dim_k_latent), jnp.float32) / math.sqrt(dim_k)
    Wv = jax.random.normal(kwv, (dim_v, num_heads, dim_v_latent), jnp.float32) / math.sqrt(dim_v)
    Wo = jax.random.normal(kwo, (num_heads, dim_v_latent, output_size),
                           jnp.float32) / math.sqrt(num_heads * dim_v_latent)

    scale = 1.0 / math.sqrt(dim_k)
    ref_out, ref_w = reference(K, V, Wq, Wk, Wv, Wo, scale)

    # f32 matmul mode: tight numerical check (exact softmax/nanmean division).
    out32, w32 = scaled_dot_product_attention(K, V, Wq, Wk, Wv, Wo,
                                              mm_dtype=jnp.float32)
    out32 = jax.block_until_ready(out32)
    w32 = jax.block_until_ready(w32)
    assert out32.shape == (B, output_size)
    assert w32.shape == (B, L, num_heads)
    assert jnp.allclose(out32, ref_out, atol=2e-3, rtol=2e-3)
    assert jnp.allclose(w32, ref_w, atol=2e-3, rtol=2e-3)

    # bf16 matmul mode (default; MXU-native on v6e/v7x): looser check.
    out16, w16 = scaled_dot_product_attention(K, V, Wq, Wk, Wv, Wo)
    out16 = jax.block_until_ready(out16)
    w16 = jax.block_until_ready(w16)
    assert out16.shape == (B, output_size)
    assert w16.shape == (B, L, num_heads)
    assert jnp.allclose(out16, ref_out, atol=2e-2, rtol=2e-2)

    print("KERNEL_OK")
</pallas_src>

<mosaic_0001>
module attributes {stable_mosaic.version = 11 : i64} {
  func.func @_sdpa_kernel(%arg0: i32, %arg1: memref<64x32xf32, #tpu.memory_space<vmem>>, %arg2: memref<64x32xf32, #tpu.memory_space<vmem>>, %arg3: memref<32x4xf32, #tpu.memory_space<vmem>>, %arg4: memref<32x128xf32, #tpu.memory_space<vmem>>, %arg5: memref<4x128xf32, #tpu.memory_space<vmem>>, %arg6: memref<128x16xf32, #tpu.memory_space<vmem>>, %arg7: memref<8x16xf32, #tpu.memory_space<vmem>>, %arg8: memref<8x32xf32, #tpu.memory_space<vmem>>) attributes {dimension_semantics = [#tpu.dimension_semantics<parallel>], iteration_bounds = array<i64: 1>, scalar_prefetch = 0 : i64, scratch_operands = 0 : i64, tpu.core_type = #tpu.core_type<tc>, window_params = [{transform_indices = @transform_0, window_bounds = array<i64: 64, 32>}, {transform_indices = @transform_1, window_bounds = array<i64: 64, 32>}, {pipeline_mode = #tpu.pipeline_mode<synchronous>, transform_indices = @transform_2, window_bounds = array<i64: 32, 4>}, {pipeline_mode = #tpu.pipeline_mode<synchronous>, transform_indices = @transform_3, window_bounds = array<i64: 32, 128>}, {pipeline_mode = #tpu.pipeline_mode<synchronous>, transform_indices = @transform_4, window_bounds = array<i64: 4, 128>}, {pipeline_mode = #tpu.pipeline_mode<synchronous>, transform_indices = @transform_5, window_bounds = array<i64: 128, 16>}, {transform_indices = @transform_6, window_bounds = array<i64: 8, 16>}, {transform_indices = @transform_7, window_bounds = array<i64: 8, 32>}]} {
    %c0 = arith.constant 0 : index
    %c0_0 = arith.constant 0 : index
    %0 = vector.load %arg1[%c0, %c0_0] : memref<64x32xf32, #tpu.memory_space<vmem>>, vector<64x32xf32>
    %c0_1 = arith.constant 0 : index
    %c0_2 = arith.constant 0 : index
    %1 = vector.load %arg2[%c0_1, %c0_2] : memref<64x32xf32, #tpu.memory_space<vmem>>, vector<64x32xf32>
    %c0_3 = arith.constant 0 : index
    %c0_4 = arith.constant 0 : index
    %2 = vector.load %arg3[%c0_3, %c0_4] : memref<32x4xf32, #tpu.memory_space<vmem>>, vector<32x4xf32>
    %cst = arith.constant dense<0.000000e+00> : vector<64x4xf32>
    %3 = tpu.matmul %0, %2, %cst {dimension_numbers = #tpu.dot_dimension_numbers<[1], [0], [0], [1], [0, 0, 1, 1], [], []>} : vector<64x32xf32>, vector<32x4xf32>, vector<64x4xf32> -> vector<64x4xf32>
    %4 = vector.extract_strided_slice %0 {offsets = [0, 0], sizes = [64, 1], strides = [1, 1]} : vector<64x32xf32> to vector<64x1xf32>
    %5 = arith.cmpf one, %4, %4 : vector<64x1xf32>
    %cst_5 = arith.constant 0.176776692 : f32
    %6 = vector.broadcast %cst_5 : f32 to vector<64x4xf32>
    %7 = arith.mulf %6, %3 : vector<64x4xf32>
    %cst_6 = arith.constant 0xFF800000 : f32
    %8 = vector.shape_cast %5 : vector<64x1xi1> to vector<64x1xi1>
    %9 = vector.broadcast %8 : vector<64x1xi1> to vector<64x4xi1>
    %10 = vector.broadcast %cst_6 : f32 to vector<64x4xf32>
    %11 = arith.select %9, %10, %7 : vector<64x4xi1>, vector<64x4xf32>
    %12 = vector.shape_cast %11 : vector<64x4xf32> to vector<8x8x4xf32>
    %cst_7 = arith.constant dense<0xFF800000> : vector<8x4xf32>
    %13 = vector.multi_reduction <maximumf>, %12, %cst_7 [1] : vector<8x8x4xf32> to vector<8x4xf32>
    %14 = vector.shape_cast %13 : vector<8x4xf32> to vector<8x1x4xf32>
    %15 = vector.broadcast %14 : vector<8x1x4xf32> to vector<8x8x4xf32>
    %16 = arith.subf %12, %15 : vector<8x8x4xf32>
    %17 = math.exp %16 : vector<8x8x4xf32>
    %cst_8 = arith.constant dense<0.000000e+00> : vector<8x4xf32>
    %18 = vector.multi_reduction <add>, %17, %cst_8 [1] : vector<8x8x4xf32> to vector<8x4xf32>
    %19 = vector.shape_cast %18 : vector<8x4xf32> to vector<8x1x4xf32>
    %20 = vector.broadcast %19 : vector<8x1x4xf32> to vector<8x8x4xf32>
    %21 = arith.divf %17, %20 : vector<8x8x4xf32>
    %22 = vector.shape_cast %21 : vector<8x8x4xf32> to vector<8x32xf32>
    %c0_9 = arith.constant 0 : index
    %c0_10 = arith.constant 0 : index
    %23 = vector.load %arg8[%c0_9, %c0_10] : memref<8x32xf32, #tpu.memory_space<vmem>>, vector<8x32xf32>
    tpu.vector_store %arg8[%c0_9, %c0_10], %22 {strides = array<i32>} : memref<8x32xf32, #tpu.memory_space<vmem>>, vector<8x32xf32>,
    %c0_11 = arith.constant 0 : index
    %c0_12 = arith.constant 0 : index
    %24 = vector.load %arg4[%c0_11, %c0_12] : memref<32x128xf32, #tpu.memory_space<vmem>>, vector<32x128xf32>
    %cst_13 = arith.constant dense<0.000000e+00> : vector<64x128xf32>
    %25 = tpu.matmul %1, %24, %cst_13 {dimension_numbers = #tpu.dot_dimension_numbers<[1], [0], [0], [1], [0, 0, 1, 1], [], []>} : vector<64x32xf32>, vector<32x128xf32>, vector<64x128xf32> -> vector<64x128xf32>
    %26 = arith.cmpf one, %1, %1 : vector<64x32xf32>
    %27 = arith.extui %26 : vector<64x32xi1> to vector<64x32xi32>
    %28 = arith.sitofp %27 : vector<64x32xi32> to vector<64x32xf32>
    %cst_14 = arith.constant dense<0xFF800000> : vector<64xf32>
    %29 = vector.multi_reduction <maximumf>, %28, %cst_14 [1] : vector<64x32xf32> to vector<64xf32>
    %30 = vector.shape_cast %29 : vector<64xf32> to vector<64x1xf32>
    %cst_15 = arith.constant 0.000000e+00 : f32
    %31 = vector.broadcast %cst_15 : f32 to vector<64x1xf32>
    %32 = arith.cmpf ogt, %30, %31 : vector<64x1xf32>
    %cst_16 = arith.constant 0.000000e+00 : f32
    %33 = vector.shape_cast %32 : vector<64x1xi1> to vector<64x1xi1>
    %34 = vector.broadcast %33 : vector<64x1xi1> to vector<64x128xi1>
    %35 = vector.broadcast %cst_16 : f32 to vector<64x128xf32>
    %36 = arith.select %34, %35, %25 : vector<64x128xi1>, vector<64x128xf32>
    %37 = vector.shape_cast %21 : vector<8x8x4xf32> to vector<64x4xf32>
    %c0_17 = arith.constant 0 : index
    %c0_18 = arith.constant 0 : index
    %38 = vector.load %arg5[%c0_17, %c0_18] : memref<4x128xf32, #tpu.memory_space<vmem>>, vector<4x128xf32>
    %cst_19 = arith.constant dense<0.000000e+00> : vector<64x128xf32>
    %39 = tpu.matmul %37, %38, %cst_19 {dimension_numbers = #tpu.dot_dimension_numbers<[1], [0], [0], [1], [0, 0, 1, 1], [], []>} : vector<64x4xf32>, vector<4x128xf32>, vector<64x128xf32> -> vector<64x128xf32>
    %40 = arith.mulf %39, %36 : vector<64x128xf32>
    %41 = vector.shape_cast %40 : vector<64x128xf32> to vector<8x8x128xf32>
    %cst_20 = arith.constant dense<0.000000e+00> : vector<8x128xf32>
    %42 = vector.multi_reduction <add>, %41, %cst_20 [1] : vector<8x8x128xf32> to vector<8x128xf32>
    %43 = arith.extui %32 : vector<64x1xi1> to vector<64x1xi32>
    %44 = arith.sitofp %43 : vector<64x1xi32> to vector<64x1xf32>
    %cst_21 = arith.constant 1.000000e+00 : f32
    %45 = vector.broadcast %cst_21 : f32 to vector<64x1xf32>
    %46 = arith.subf %45, %44 : vector<64x1xf32>
    %47 = vector.shape_cast %46 : vector<64x1xf32> to vector<8x8xf32>
    %cst_22 = arith.constant dense<0.000000e+00> : vector<8xf32>
    %48 = vector.multi_reduction <add>, %47, %cst_22 [1] : vector<8x8xf32> to vector<8xf32>
    %49 = vector.shape_cast %48 : vector<8xf32> to vector<8x1xf32>
    %50 = vector.broadcast %49 : vector<8x1xf32> to vector<8x128xf32>
    %51 = arith.divf %42, %50 : vector<8x128xf32>
    %c0_23 = arith.constant 0 : index
    %c0_24 = arith.constant 0 : index
    %52 = vector.load %arg6[%c0_23, %c0_24] : memref<128x16xf32, #tpu.memory_space<vmem>>, vector<128x16xf32>
    %cst_25 = arith.constant dense<0.000000e+00> : vector<8x16xf32>
    %53 = tpu.matmul %51, %52, %cst_25 {dimension_numbers = #tpu.dot_dimension_numbers<[1], [0], [0], [1], [0, 0, 1, 1], [], []>} : vector<8x128xf32>, vector<128x16xf32>, vector<8x16xf32> -> vector<8x16xf32>
    %c0_26 = arith.constant 0 : index
    %c0_27 = arith.constant 0 : index
    %54 = vector.load %arg7[%c0_26, %c0_27] : memref<8x16xf32, #tpu.memory_space<vmem>>, vector<8x16xf32>
    tpu.vector_store %arg7[%c0_26, %c0_27], %53 {strides = array<i32>} : memref<8x16xf32, #tpu.memory_space<vmem>>, vector<8x16xf32>,
    return
  }
  func.func @transform_0(%arg0: i32) -> (i32, i32) {
    %c0_i32 = arith.constant 0 : i32
    %c0_i32_0 = arith.constant 0 : i32
    return %arg0, %c0_i32 : i32, i32
  }
  func.func @transform_1(%arg0: i32) -> (i32, i32) {
    %c0_i32 = arith.constant 0 : i32
    %c0_i32_0 = arith.constant 0 : i32
    return %arg0, %c0_i32 : i32, i32
  }
  func.func @transform_2(%arg0: i32) -> (i32, i32) {
    %c0_i32 = arith.constant 0 : i32
    %c0_i32_0 = arith.constant 0 : i32
    %c0_i32_1 = arith.constant 0 : i32
    return %c0_i32, %c0_i32_0 : i32, i32
  }
  func.func @transform_3(%arg0: i32) -> (i32, i32) {
    %c0_i32 = arith.constant 0 : i32
    %c0_i32_0 = arith.constant 0 : i32
    %c0_i32_1 = arith.constant 0 : i32
    return %c0_i32, %c0_i32_0 : i32, i32
  }
  func.func @transform_4(%arg0: i32) -> (i32, i32) {
    %c0_i32 = arith.constant 0 : i32
    %c0_i32_0 = arith.constant 0 : i32
    %c0_i32_1 = arith.constant 0 : i32
    return %c0_i32, %c0_i32_0 : i32, i32
  }
  func.func @transform_5(%arg0: i32) -> (i32, i32) {
    %c0_i32 = arith.constant 0 : i32
    %c0_i32_0 = arith.constant 0 : i32
    %c0_i32_1 = arith.constant 0 : i32
    return %c0_i32, %c0_i32_0 : i32, i32
  }
  func.func @transform_6(%arg0: i32) -> (i32, i32) {
    %c0_i32 = arith.constant 0 : i32
    %c0_i32_0 = arith.constant 0 : i32
    return %arg0, %c0_i32 : i32, i32
  }
  func.func @transform_7(%arg0: i32) -> (i32, i32) {
    %c0_i32 = arith.constant 0 : i32
    %c0_i32_0 = arith.constant 0 : i32
    return %arg0, %c0_i32 : i32, i32
  }
}

</mosaic_0001>

<llo_original>
// kernel: tpu_custom_call.1
$region0: #{tpu_custom_call.1}
  #allocation0 [shape = 'u32[]', space=smem, size = 0x4, offset = 0x4, fixed_abs, tag = 'smem constant byte address 0x4 - core index']
  #allocation1 [shape = 'u32[72,128]{1,0:T(1,128)}', space=vmem, size = 0x9000, scoped, tag = 'internal scratch']
  %s0 = inlined_call_operand.vmem [shape: f32[64,32], index: 0, kind: input, shape index: {}]
  %s1 = inlined_call_operand.vmem [shape: f32[64,32], index: 1, kind: input, shape index: {}]
  %s2 = inlined_call_operand.vmem [shape: f32[32,4], index: 2, kind: input, shape index: {}]
  %s3 = inlined_call_operand.vmem [shape: f32[32,128], index: 3, kind: input, shape index: {}]
  %s4 = inlined_call_operand.vmem [shape: f32[4,128], index: 4, kind: input, shape index: {}]
  %s5 = inlined_call_operand.vmem [shape: f32[128,16], index: 5, kind: input, shape index: {}]
  %s6 = inlined_call_operand.hbm [shape: f32[8,16], index: 6, kind: output, shape index: {0}]
  %s7 = inlined_call_operand.hbm [shape: f32[8,32], index: 7, kind: output, shape index: {1}]
  %8 = xla_tuple %s6, %s7
  %s9 = sld [smem:[#allocation0]]
  $region42: #{tpu_custom_call.1} parent=0
    _
  %s11 = ssub.s32 1, %s9
  %s12 = scalar_select 0, %s11, %s9
  $region1: #{tpu_custom_call.1} parent=0
    #allocation2 [shape = 'u8[4096]{0}', space=vmem, size = 0x1000, scoped, tag = 'output window, operand 0, single buffered']
    #allocation3 [shape = 's32[1]{0}', space=sflag, size = 0x4, scoped, tag = 'scoped memory for tpu_custom_call.1']
    #allocation4 [shape = 'u8[4096]{0}', space=vmem, size = 0x1000, scoped, tag = 'output window, operand 1, single buffered']
    #allocation5 [shape = 's32[1]{0}', space=sflag, size = 0x4, scoped, tag = 'scoped memory for tpu_custom_call.1']
    %13 = vsyncpa [#allocation3], 0
    %14 = vsyncpa [#allocation5], 0
    // Predicated region
    $region2: #{tpu_custom_call.1} parent=1 // pred_check
      _
    $region3: #{tpu_custom_call.1} parent=1 // pred_check_branch
      %16 = sbr.rel (0) target = $region5
    $region4: #{tpu_custom_call.1} parent=1 // pred_region
      _
    $region5: #{tpu_custom_call.1} parent=1 // pred_fallthru
      _
    // Predicated region
    $region6: #{tpu_custom_call.1} parent=1 // pred_check
      _
    $region7: #{tpu_custom_call.1} parent=1 // pred_check_branch
      %18 = sbr.rel (0) target = $region9
    $region8: #{tpu_custom_call.1} parent=1 // pred_region
      _
    $region9: #{tpu_custom_call.1} parent=1 // pred_fallthru
      _
    // Predicated region
    $region10: #{tpu_custom_call.1} parent=1 // pred_check
      _
    $region11: #{tpu_custom_call.1} parent=1 // pred_check_branch
      %20 = sbr.rel (0) target = $region13
    $region12: #{tpu_custom_call.1} parent=1 // pred_region
      _
    $region13: #{tpu_custom_call.1} parent=1 // pred_fallthru
      _
    // Predicated region
    $region14: #{tpu_custom_call.1} parent=1 // pred_check
      _
    $region15: #{tpu_custom_call.1} parent=1 // pred_check_branch
      %22 = sbr.rel (0) target = $region17
    $region16: #{tpu_custom_call.1} parent=1 // pred_region
      _
    $region17: #{tpu_custom_call.1} parent=1 // pred_fallthru
      _
    // Predicated region
    $region18: #{tpu_custom_call.1} parent=1 // pred_check
      _
    $region19: #{tpu_custom_call.1} parent=1 // pred_check_branch
      %24 = sbr.rel (0) target = $region21
    $region20: #{tpu_custom_call.1} parent=1 // pred_region
      _
    $region21: #{tpu_custom_call.1} parent=1 // pred_fallthru
      _
    // Predicated region
    $region22: #{tpu_custom_call.1} parent=1 // pred_check
      _
    $region23: #{tpu_custom_call.1} parent=1 // pred_check_branch
      %26 = sbr.rel (0) target = $region25
    $region24: #{tpu_custom_call.1} parent=1 // pred_region
      _
    $region25: #{tpu_custom_call.1} parent=1 // pred_fallthru
      _
    %v27 = vld [vmem:[%s0] sm:$0xff]
    %v28 = vld [vmem:[%s0 + $0x8] sm:$0xff]
    %v29 = vld [vmem:[%s0 + $0x10] sm:$0xff]
    %v30 = vld [vmem:[%s0 + $0x18] sm:$0xff]
    %v31 = vld [vmem:[%s0 + $0x20] sm:$0xff]
    %v32 = vld [vmem:[%s0 + $0x28] sm:$0xff]
    %v33 = vld [vmem:[%s0 + $0x30] sm:$0xff]
    %v34 = vld [vmem:[%s0 + $0x38] sm:$0xff]
    %v35 = vld [vmem:[%s1] sm:$0xff]
    %v36 = vld [vmem:[%s1 + $0x8] sm:$0xff]
    %v37 = vld [vmem:[%s1 + $0x10] sm:$0xff]
    %v38 = vld [vmem:[%s1 + $0x18] sm:$0xff]
    %v39 = vld [vmem:[%s1 + $0x20] sm:$0xff]
    %v40 = vld [vmem:[%s1 + $0x28] sm:$0xff]
    %v41 = vld [vmem:[%s1 + $0x30] sm:$0xff]
    %v42 = vld [vmem:[%s1 + $0x38] sm:$0xff]
    %v43 = vld [vmem:[%s2] sm:$0xff]
    %v44 = vld [vmem:[%s2 + $0x8] sm:$0xff]
    %v45 = vld [vmem:[%s2 + $0x10] sm:$0xff]
    %v46 = vld [vmem:[%s2 + $0x18] sm:$0xff]
    %vm47 = vcmask 261120
    %v49 = vsel %vm47, %v27, 0
    %v52 = vsel %vm47, %v28, 0
    %v55 = vsel %vm47, %v29, 0
    %v58 = vsel %vm47, %v30, 0
    %v61 = vsel %vm47, %v31, 0
    %v64 = vsel %vm47, %v32, 0
    %v67 = vsel %vm47, %v33, 0
    %v70 = vsel %vm47, %v34, 0
    %72 = vmatpush.msra.mxu0 0.0
    %73 = vmatpush.msra.mxu0 0.0
    %74 = vmatpush.msra.mxu0 0.0
    %75 = vmatpush.msra.mxu0 0.0
    %76 = vmatpush.msra.mxu0 0.0
    %77 = vmatpush.msra.mxu0 0.0
    %78 = vmatpush.msra.mxu0 0.0
    %79 = vmatpush.msra.mxu0 0.0
    %80 = vmatpush.msra.mxu0 0.0
    %81 = vmatpush.msra.mxu0 0.0
    %82 = vmatpush.msra.mxu0 0.0
    %83 = vmatpush.msra.mxu0 0.0
    %84 = vmatpush.msra.mxu0 %v46
    %85 = vmatpush.msra.mxu0 %v45
    %86 = vmatpush.msra.mxu0 %v44
    %87 = vmatpush.msra.mxu0 %v43
    %88 = vmatmul.f32.gmra.mxu0 %v49
    %v89 = vpop.f32.mrf.mxu0
    %v90 = vadd.f32 0.0, %v89
    %91 = vmatmul.f32.gmra.mxu0 %v52
    %v92 = vpop.f32.mrf.mxu0
    %v93 = vadd.f32 0.0, %v92
    %94 = vmatmul.f32.gmra.mxu0 %v55
    %v95 = vpop.f32.mrf.mxu0
    %v96 = vadd.f32 0.0, %v95
    %97 = vmatmul.f32.gmra.mxu0 %v58
    %v98 = vpop.f32.mrf.mxu0
    %v99 = vadd.f32 0.0, %v98
    %100 = vmatmul.f32.gmra.mxu0 %v61
    %v101 = vpop.f32.mrf.mxu0
    %v102 = vadd.f32 0.0, %v101
    %103 = vmatmul.f32.gmra.mxu0 %v64
    %v104 = vpop.f32.mrf.mxu0
    %v105 = vadd.f32 0.0, %v104
    %106 = vmatmul.f32.gmra.mxu0 %v67
    %v107 = vpop.f32.mrf.mxu0
    %v108 = vadd.f32 0.0, %v107
    %109 = vmatmul.f32.gmra.mxu0 %v70
    %v110 = vpop.f32.mrf.mxu0
    %v111 = vadd.f32 0.0, %v110
    %112 = vdwg.mxu0
    %vm113 = vcmp.ne.f32.partialorder %v27, %v27
    %vm114 = vcmp.ne.f32.partialorder %v28, %v28
    %vm115 = vcmp.ne.f32.partialorder %v29, %v29
    %vm116 = vcmp.ne.f32.partialorder %v30, %v30
    %vm117 = vcmp.ne.f32.partialorder %v31, %v31
    %vm118 = vcmp.ne.f32.partialorder %v32, %v32
    %vm119 = vcmp.ne.f32.partialorder %v33, %v33
    %vm120 = vcmp.ne.f32.partialorder %v34, %v34
    %v121 = vmul.f32 %v90, 0.17677669
    %v122 = vmul.f32 %v93, 0.17677669
    %v123 = vmul.f32 %v96, 0.17677669
    %v124 = vmul.f32 %v99, 0.17677669
    %v125 = vmul.f32 %v102, 0.17677669
    %v126 = vmul.f32 %v105, 0.17677669
    %v127 = vmul.f32 %v108, 0.17677669
    %v128 = vmul.f32 %v111, 0.17677669
    %v129 = vsel %vm113, 1, 0
    %v130 = vsel %vm114, 1, 0
    %v131 = vsel %vm115, 1, 0
    %v132 = vsel %vm116, 1, 0
    %v133 = vsel %vm117, 1, 0
    %v134 = vsel %vm118, 1, 0
    %v135 = vsel %vm119, 1, 0
    %v136 = vsel %vm120, 1, 0
    %137 = vset.pattern.permute.xlu0 0
    %138 = vperm.xlu0 %137, %v129
    %v139 = vpop.permute.xlu0 %138
    %140 = vset.pattern.permute.xlu0 0
    %141 = vperm.xlu0 %140, %v130
    %v142 = vpop.permute.xlu0 %141
    %143 = vset.pattern.permute.xlu0 0
    %144 = vperm.xlu0 %143, %v131
    %v145 = vpop.permute.xlu0 %144
    %146 = vset.pattern.permute.xlu0 0
    %147 = vperm.xlu0 %146, %v132
    %v148 = vpop.permute.xlu0 %147
    %149 = vset.pattern.permute.xlu0 0
    %150 = vperm.xlu0 %149, %v133
    %v151 = vpop.permute.xlu0 %150
    %152 = vset.pattern.permute.xlu0 0
    %153 = vperm.xlu0 %152, %v134
    %v154 = vpop.permute.xlu0 %153
    %155 = vset.pattern.permute.xlu0 0
    %156 = vperm.xlu0 %155, %v135
    %v157 = vpop.permute.xlu0 %156
    %158 = vset.pattern.permute.xlu0 0
    %159 = vperm.xlu0 %158, %v136
    %v160 = vpop.permute.xlu0 %159
    %vm161 = vcmp.eq.s32.totalorder %v139, 1
    %vm162 = vcmp.eq.s32.totalorder %v142, 1
    %vm163 = vcmp.eq.s32.totalorder %v145, 1
    %vm164 = vcmp.eq.s32.totalorder %v148, 1
    %vm165 = vcmp.eq.s32.totalorder %v151, 1
    %vm166 = vcmp.eq.s32.totalorder %v154, 1
    %vm167 = vcmp.eq.s32.totalorder %v157, 1
    %vm168 = vcmp.eq.s32.totalorder %v160, 1
    %v169 = vsel %vm161, -inf, %v121
    %v170 = vsel %vm162, -inf, %v122
    %v171 = vsel %vm163, -inf, %v123
    %v172 = vsel %vm164, -inf, %v124
    %v173 = vsel %vm165, -inf, %v125
    %v174 = vsel %vm166, -inf, %v126
    %v175 = vsel %vm167, -inf, %v127
    %v176 = vsel %vm168, -inf, %v128
    %vm177 = vcmask 31744
    %v178 = vsel %vm177, %v169, -inf
    %v179 = vrot.slane %v178, 4
    %v180 = vmax.f32 %v178, %v179
    %v181 = vrot.slane %v180, 2
    %v182 = vmax.f32 %v180, %v181
    %v183 = vrot.slane %v182, 1
    %v184 = vmax.f32 %v182, %v183
    %v185 = vsel %vm177, %v170, -inf
    %v186 = vrot.slane %v185, 4
    %v187 = vmax.f32 %v185, %v186
    %v188 = vrot.slane %v187, 2
    %v189 = vmax.f32 %v187, %v188
    %v190 = vrot.slane %v189, 1
    %v191 = vmax.f32 %v189, %v190
    %v192 = vsel %vm177, %v171, -inf
    %v193 = vrot.slane %v192, 4
    %v194 = vmax.f32 %v192, %v193
    %v195 = vrot.slane %v194, 2
    %v196 = vmax.f32 %v194, %v195
    %v197 = vrot.slane %v196, 1
    %v198 = vmax.f32 %v196, %v197
    %v199 = vsel %vm177, %v172, -inf
    %v200 = vrot.slane %v199, 4
    %v201 = vmax.f32 %v199, %v200
    %v202 = vrot.slane %v201, 2
    %v203 = vmax.f32 %v201, %v202
    %v204 = vrot.slane %v203, 1
    %v205 = vmax.f32 %v203, %v204
    %v206 = vsel %vm177, %v173, -inf
    %v207 = vrot.slane %v206, 4
    %v208 = vmax.f32 %v206, %v207
    %v209 = vrot.slane %v208, 2
    %v210 = vmax.f32 %v208, %v209
    %v211 = vrot.slane %v210, 1
    %v212 = vmax.f32 %v210, %v211
    %v213 = vsel %vm177, %v174, -inf
    %v214 = vrot.slane %v213, 4
    %v215 = vmax.f32 %v213, %v214
    %v216 = vrot.slane %v215, 2
    %v217 = vmax.f32 %v215, %v216
    %v218 = vrot.slane %v217, 1
    %v219 = vmax.f32 %v217, %v218
    %v220 = vsel %vm177, %v175, -inf
    %v221 = vrot.slane %v220, 4
    %v222 = vmax.f32 %v220, %v221
    %v223 = vrot.slane %v222, 2
    %v224 = vmax.f32 %v222, %v223
    %v225 = vrot.slane %v224, 1
    %v226 = vmax.f32 %v224, %v225
    %v227 = vsel %vm177, %v176, -inf
    %v228 = vrot.slane %v227, 4
    %v229 = vmax.f32 %v227, %v228
    %v230 = vrot.slane %v229, 2
    %v231 = vmax.f32 %v229, %v230
    %v232 = vrot.slane %v231, 1
    %v233 = vmax.f32 %v231, %v232
    %v234 = vsub.f32 %v169, %v184
    %v235 = vsub.f32 %v170, %v191
    %v236 = vsub.f32 %v171, %v198
    %v237 = vsub.f32 %v172, %v205
    %v238 = vsub.f32 %v173, %v212
    %v239 = vsub.f32 %v174, %v219
    %v240 = vsub.f32 %v175, %v226
    %v241 = vsub.f32 %v176, %v233
    %v242 = vmul.f32 %v234, 1.442695
    %v243 = vpow.pop %v242
    %v244 = vmul.f32 %v235, 1.442695
    %v245 = vpow.pop %v244
    %v246 = vmul.f32 %v236, 1.442695
    %v247 = vpow.pop %v246
    %v248 = vmul.f32 %v237, 1.442695
    %v249 = vpow.pop %v248
    %v250 = vmul.f32 %v238, 1.442695
    %v251 = vpow.pop %v250
    %v252 = vmul.f32 %v239, 1.442695
    %v253 = vpow.pop %v252
    %v254 = vmul.f32 %v240, 1.442695
    %v255 = vpow.pop %v254
    %v256 = vmul.f32 %v241, 1.442695
    %v257 = vpow.pop %v256
    %v258 = vsel %vm177, %v243, 0.0
    %v259 = vrot.slane %v258, 4
    %v260 = vadd.f32 %v258, %v259
    %v261 = vrot.slane %v260, 2
    %v262 = vadd.f32 %v260, %v261
    %v263 = vrot.slane %v262, 1
    %v264 = vadd.f32 %v262, %v263
    %v265 = vsel %vm177, %v245, 0.0
    %v266 = vrot.slane %v265, 4
    %v267 = vadd.f32 %v265, %v266
    %v268 = vrot.slane %v267, 2
    %v269 = vadd.f32 %v267, %v268
    %v270 = vrot.slane %v269, 1
    %v271 = vadd.f32 %v269, %v270
    %v272 = vsel %vm177, %v247, 0.0
    %v273 = vrot.slane %v272, 4
    %v274 = vadd.f32 %v272, %v273
    %v275 = vrot.slane %v274, 2
    %v276 = vadd.f32 %v274, %v275
    %v277 = vrot.slane %v276, 1
    %v278 = vadd.f32 %v276, %v277
    %v279 = vsel %vm177, %v249, 0.0
    %v280 = vrot.slane %v279, 4
    %v281 = vadd.f32 %v279, %v280
    %v282 = vrot.slane %v281, 2
    %v283 = vadd.f32 %v281, %v282
    %v284 = vrot.slane %v283, 1
    %v285 = vadd.f32 %v283, %v284
    %v286 = vsel %vm177, %v251, 0.0
    %v287 = vrot.slane %v286, 4
    %v288 = vadd.f32 %v286, %v287
    %v289 = vrot.slane %v288, 2
    %v290 = vadd.f32 %v288, %v289
    %v291 = vrot.slane %v290, 1
    %v292 = vadd.f32 %v290, %v291
    %v293 = vsel %vm177, %v253, 0.0
    %v294 = vrot.slane %v293, 4
    %v295 = vadd.f32 %v293, %v294
    %v296 = vrot.slane %v295, 2
    %v297 = vadd.f32 %v295, %v296
    %v298 = vrot.slane %v297, 1
    %v299 = vadd.f32 %v297, %v298
    %v300 = vsel %vm177, %v255, 0.0
    %v301 = vrot.slane %v300, 4
    %v302 = vadd.f32 %v300, %v301
    %v303 = vrot.slane %v302, 2
    %v304 = vadd.f32 %v302, %v303
    %v305 = vrot.slane %v304, 1
    %v306 = vadd.f32 %v304, %v305
    %v307 = vsel %vm177, %v257, 0.0
    %v308 = vrot.slane %v307, 4
    %v309 = vadd.f32 %v307, %v308
    %v310 = vrot.slane %v309, 2
    %v311 = vadd.f32 %v309, %v310
    %v312 = vrot.slane %v311, 1
    %v313 = vadd.f32 %v311, %v312
    %v314 = vrcp.pop %v264
    %v315 = vmul.f32 %v264, %v314
    %v316 = vsub.f32 1.0, %v315
    %v317 = vmul.f32 %v314, %v316
    %v318 = vadd.f32 %v314, %v317
    %vm319 = vweird.f32 %v264
    %vm320 = vweird.f32 %v314
    %vm321 = vmor %vm319, %vm320
    %v322 = vsel %vm321, %v314, %v318
    %v323 = vand.u32 2147483647, %v264
    %vm324 = vcmp.eq.f32.partialorder %v323, 8.507059e+37
    %v325 = vand.u32 %v264, 2147483648
    %v326 = vor.u32 1.1754944e-38, %v325
    %v327 = vsel %vm324, %v326, %v322
    %v328 = vmul.f32 %v243, %v327
    %v329 = vrcp.pop %v271
    %v330 = vmul.f32 %v271, %v329
    %v331 = vsub.f32 1.0, %v330
    %v332 = vmul.f32 %v329, %v331
    %v333 = vadd.f32 %v329, %v332
    %vm334 = vweird.f32 %v271
    %vm335 = vweird.f32 %v329
    %vm336 = vmor %vm334, %vm335
    %v337 = vsel %vm336, %v329, %v333
    %v338 = vand.u32 2147483647, %v271
    %vm339 = vcmp.eq.f32.partialorder %v338, 8.507059e+37
    %v340 = vand.u32 %v271, 2147483648
    %v341 = vor.u32 1.1754944e-38, %v340
    %v342 = vsel %vm339, %v341, %v337
    %v343 = vmul.f32 %v245, %v342
    %v344 = vrcp.pop %v278
    %v345 = vmul.f32 %v278, %v344
    %v346 = vsub.f32 1.0, %v345
    %v347 = vmul.f32 %v344, %v346
    %v348 = vadd.f32 %v344, %v347
    %vm349 = vweird.f32 %v278
    %vm350 = vweird.f32 %v344
    %vm351 = vmor %vm349, %vm350
    %v352 = vsel %vm351, %v344, %v348
    %v353 = vand.u32 2147483647, %v278
    %vm354 = vcmp.eq.f32.partialorder %v353, 8.507059e+37
    %v355 = vand.u32 %v278, 2147483648
    %v356 = vor.u32 1.1754944e-38, %v355
    %v357 = vsel %vm354, %v356, %v352
    %v358 = vmul.f32 %v247, %v357
    %v359 = vrcp.pop %v285
    %v360 = vmul.f32 %v285, %v359
    %v361 = vsub.f32 1.0, %v360
    %v362 = vmul.f32 %v359, %v361
    %v363 = vadd.f32 %v359, %v362
    %vm364 = vweird.f32 %v285
    %vm365 = vweird.f32 %v359
    %vm366 = vmor %vm364, %vm365
    %v367 = vsel %vm366, %v359, %v363
    %v368 = vand.u32 2147483647, %v285
    %vm369 = vcmp.eq.f32.partialorder %v368, 8.507059e+37
    %v370 = vand.u32 %v285, 2147483648
    %v371 = vor.u32 1.1754944e-38, %v370
    %v372 = vsel %vm369, %v371, %v367
    %v373 = vmul.f32 %v249, %v372
    %v374 = vrcp.pop %v292
    %v375 = vmul.f32 %v292, %v374
    %v376 = vsub.f32 1.0, %v375
    %v377 = vmul.f32 %v374, %v376
    %v378 = vadd.f32 %v374, %v377
    %vm379 = vweird.f32 %v292
    %vm380 = vweird.f32 %v374
    %vm381 = vmor %vm379, %vm380
    %v382 = vsel %vm381, %v374, %v378
    %v383 = vand.u32 2147483647, %v292
    %vm384 = vcmp.eq.f32.partialorder %v383, 8.507059e+37
    %v385 = vand.u32 %v292, 2147483648
    %v386 = vor.u32 1.1754944e-38, %v385
    %v387 = vsel %vm384, %v386, %v382
    %v388 = vmul.f32 %v251, %v387
    %v389 = vrcp.pop %v299
    %v390 = vmul.f32 %v299, %v389
    %v391 = vsub.f32 1.0, %v390
    %v392 = vmul.f32 %v389, %v391
    %v393 = vadd.f32 %v389, %v392
    %vm394 = vweird.f32 %v299
    %vm395 = vweird.f32 %v389
    %vm396 = vmor %vm394, %vm395
    %v397 = vsel %vm396, %v389, %v393
    %v398 = vand.u32 2147483647, %v299
    %vm399 = vcmp.eq.f32.partialorder %v398, 8.507059e+37
    %v400 = vand.u32 %v299, 2147483648
    %v401 = vor.u32 1.1754944e-38, %v400
    %v402 = vsel %vm399, %v401, %v397
    %v403 = vmul.f32 %v253, %v402
    %v404 = vrcp.pop %v306
    %v405 = vmul.f32 %v306, %v404
    %v406 = vsub.f32 1.0, %v405
    %v407 = vmul.f32 %v404, %v406
    %v408 = vadd.f32 %v404, %v407
    %vm409 = vweird.f32 %v306
    %vm410 = vweird.f32 %v404
    %vm411 = vmor %vm409, %vm410
    %v412 = vsel %vm411, %v404, %v408
    %v413 = vand.u32 2147483647, %v306
    %vm414 = vcmp.eq.f32.partialorder %v413, 8.507059e+37
    %v415 = vand.u32 %v306, 2147483648
    %v416 = vor.u32 1.1754944e-38, %v415
    %v417 = vsel %vm414, %v416, %v412
    %v418 = vmul.f32 %v255, %v417
    %v419 = vrcp.pop %v313
    %v420 = vmul.f32 %v313, %v419
    %v421 = vsub.f32 1.0, %v420
    %v422 = vmul.f32 %v419, %v421
    %v423 = vadd.f32 %v419, %v422
    %vm424 = vweird.f32 %v313
    %vm425 = vweird.f32 %v419
    %vm426 = vmor %vm424, %vm425
    %v427 = vsel %vm426, %v419, %v423
    %v428 = vand.u32 2147483647, %v313
    %vm429 = vcmp.eq.f32.partialorder %v428, 8.507059e+37
    %v430 = vand.u32 %v313, 2147483648
    %v431 = vor.u32 1.1754944e-38, %v430
    %v432 = vsel %vm429, %v431, %v427
    %v433 = vmul.f32 %v257, %v432
    %v434 = vrot.slane %v358, 4
    %vm435 = vcmask 1047556
    %v436 = vsel %vm435, %v434, %v328
    %v437 = vrot.slane %v328, 4
    %v438 = vsel %vm435, %v358, %v437
    %v440 = vunpack.c.l.s4 1983009808
    %v441 = vunpack.c.0.s8 %v440
    %v442 = vperm.slane %v436, %v441
    %v444 = vunpack.c.l.s4 1983009808
    %v445 = vunpack.c.0.s8 %v444
    %v446 = vperm.slane %v438, %v445
    %v447 = vrot.slane %v373, 4
    %v448 = vsel %vm435, %v447, %v343
    %v449 = vrot.slane %v343, 4
    %v450 = vsel %vm435, %v373, %v449
    %v452 = vunpack.c.l.s4 1983009808
    %v453 = vunpack.c.0.s8 %v452
    %v454 = vperm.slane %v448, %v453
    %v456 = vunpack.c.l.s4 1983009808
    %v457 = vunpack.c.0.s8 %v456
    %v458 = vperm.slane %v450, %v457
    %v459 = vrot.slane %v418, 4
    %v460 = vsel %vm435, %v459, %v388
    %v461 = vrot.slane %v388, 4
    %v462 = vsel %vm435, %v418, %v461
    %v464 = vunpack.c.l.s4 1983009808
    %v465 = vunpack.c.0.s8 %v464
    %v466 = vperm.slane %v460, %v465
    %v468 = vunpack.c.l.s4 1983009808
    %v469 = vunpack.c.0.s8 %v468
    %v470 = vperm.slane %v462, %v469
    %v471 = vrot.slane %v433, 4
    %v472 = vsel %vm435, %v471, %v403
    %v473 = vrot.slane %v403, 4
    %v474 = vsel %vm435, %v433, %v473
    %v476 = vunpack.c.l.s4 1983009808
    %v477 = vunpack.c.0.s8 %v476
    %v478 = vperm.slane %v472, %v477
    %v480 = vunpack.c.l.s4 1983009808
    %v481 = vunpack.c.0.s8 %v480
    %v482 = vperm.slane %v474, %v481
    %v483 = vrot.slane %v454, 4
    %v484 = vsel %vm435, %v483, %v442
    %v485 = vrot.slane %v442, 4
    %v486 = vsel %vm435, %v454, %v485
    %v488 = vunpack.c.l.s4 1934713408
    %v489 = vunpack.c.0.s8 %v488
    %v490 = vperm.slane %v484, %v489
    %v492 = vunpack.c.l.s4 1934713408
    %v493 = vunpack.c.0.s8 %v492
    %v494 = vperm.slane %v486, %v493
    %v495 = vrot.slane %v458, 4
    %v496 = vsel %vm435, %v495, %v446
    %v497 = vrot.slane %v446, 4
    %v498 = vsel %vm435, %v458, %v497
    %v500 = vunpack.c.l.s4 1934713408
    %v501 = vunpack.c.0.s8 %v500
    %v502 = vperm.slane %v496, %v501
    %v504 = vunpack.c.l.s4 1934713408
    %v505 = vunpack.c.0.s8 %v504
    %v506 = vperm.slane %v498, %v505
    %v507 = vrot.slane %v478, 4
    %v508 = vsel %vm435, %v507, %v466
    %v509 = vrot.slane %v466, 4
    %v510 = vsel %vm435, %v478, %v509
    %v512 = vunpack.c.l.s4 1934713408
    %v513 = vunpack.c.0.s8 %v512
    %v514 = vperm.slane %v508, %v513
    %v516 = vunpack.c.l.s4 1934713408
    %v517 = vunpack.c.0.s8 %v516
    %v518 = vperm.slane %v510, %v517
    %v519 = vrot.slane %v482, 4
    %v520 = vsel %vm435, %v519, %v470
    %v521 = vrot.slane %v470, 4
    %v522 = vsel %vm435, %v482, %v521
    %v524 = vunpack.c.l.s4 1934713408
    %v525 = vunpack.c.0.s8 %v524
    %v526 = vperm.slane %v520, %v525
    %v528 = vunpack.c.l.s4 1934713408
    %v529 = vunpack.c.0.s8 %v528
    %v530 = vperm.slane %v522, %v529
    %v531 = vrot.slane %v514, 4
    %v532 = vsel %vm435, %v531, %v490
    %v533 = vrot.slane %v490, 4
    %v534 = vsel %vm435, %v514, %v533
    %v535 = vrot.slane %v518, 4
    %v536 = vsel %vm435, %v535, %v494
    %v537 = vrot.slane %v494, 4
    %v538 = vsel %vm435, %v518, %v537
    %v539 = vrot.slane %v526, 4
    %v540 = vsel %vm435, %v539, %v502
    %v541 = vrot.slane %v502, 4
    %v542 = vsel %vm435, %v526, %v541
    %v543 = vrot.slane %v530, 4
    %v544 = vsel %vm435, %v543, %v506
    %v545 = vrot.slane %v506, 4
    %v546 = vsel %vm435, %v530, %v545
    %548 = vrot.lane.b32.xlu0 %v534, 4
    %v549 = vpop.permute.xlu0 %548
    %552 = vrot.lane.b32.xlu0 %v536, 8
    %v553 = vpop.permute.xlu0 %552
    %556 = vrot.lane.b32.xlu0 %v538, 12
    %v557 = vpop.permute.xlu0 %556
    %560 = vrot.lane.b32.xlu0 %v540, 16
    %v561 = vpop.permute.xlu0 %560
    %564 = vrot.lane.b32.xlu0 %v542, 20
    %v565 = vpop.permute.xlu0 %564
    %568 = vrot.lane.b32.xlu0 %v544, 24
    %v569 = vpop.permute.xlu0 %568
    %572 = vrot.lane.b32.xlu0 %v546, 28
    %v573 = vpop.permute.xlu0 %572
    %v575 = vsel %vm177, %v532, %v549
    %vm576 = vcmask 64512
    %v577 = vsel %vm576, %v575, %v553
    %vm578 = vcmask 97280
    %v579 = vsel %vm578, %v577, %v557
    %vm580 = vcmask 130048
    %v581 = vsel %vm580, %v579, %v561
    %vm582 = vcmask 162816
    %v583 = vsel %vm582, %v581, %v565
    %vm584 = vcmask 195584
    %v585 = vsel %vm584, %v583, %v569
    %vm586 = vcmask 228352
    %v587 = vsel %vm586, %v585, %v573
    %588 = vst.msk [vmem:[#allocation4] sm:$0xff] %vm47, %v587
    %v589 = vld [vmem:[%s3] sm:$0xff]
    %v590 = vld [vmem:[%s3 + $0x8] sm:$0xff]
    %v591 = vld [vmem:[%s3 + $0x10] sm:$0xff]
    %v592 = vld [vmem:[%s3 + $0x18] sm:$0xff]
    %v594 = vsel %vm47, %v35, 0
    %v597 = vsel %vm47, %v36, 0
    %v600 = vsel %vm47, %v37, 0
    %v603 = vsel %vm47, %v38, 0
    %v606 = vsel %vm47, %v39, 0
    %v609 = vsel %vm47, %v40, 0
    %v612 = vsel %vm47, %v41, 0
    %v615 = vsel %vm47, %v42, 0
    %617 = vmatpush.msra.mxu0 0.0
    %618 = vmatpush.msra.mxu0 0.0
    %619 = vmatpush.msra.mxu0 0.0
    %620 = vmatpush.msra.mxu0 0.0
    %621 = vmatpush.msra.mxu0 0.0
    %622 = vmatpush.msra.mxu0 0.0
    %623 = vmatpush.msra.mxu0 0.0
    %624 = vmatpush.msra.mxu0 0.0
    %625 = vmatpush.msra.mxu0 0.0
    %626 = vmatpush.msra.mxu0 0.0
    %627 = vmatpush.msra.mxu0 0.0
    %628 = vmatpush.msra.mxu0 0.0
    %629 = vmatpush.msra.mxu0 %v592
    %630 = vmatpush.msra.mxu0 %v591
    %631 = vmatpush.msra.mxu0 %v590
    %632 = vmatpush.msra.mxu0 %v589
    %633 = vmatmul.f32.gmra.mxu0 %v594
    %v634 = vpop.f32.mrf.mxu0
    %v635 = vadd.f32 0.0, %v634
    %636 = vmatmul.f32.gmra.mxu0 %v597
    %v637 = vpop.f32.mrf.mxu0
    %v638 = vadd.f32 0.0, %v637
    %639 = vmatmul.f32.gmra.mxu0 %v600
    %v640 = vpop.f32.mrf.mxu0
    %v641 = vadd.f32 0.0, %v640
    %642 = vmatmul.f32.gmra.mxu0 %v603
    %v643 = vpop.f32.mrf.mxu0
    %v644 = vadd.f32 0.0, %v643
    %645 = vmatmul.f32.gmra.mxu0 %v606
    %v646 = vpop.f32.mrf.mxu0
    %v647 = vadd.f32 0.0, %v646
    %648 = vmatmul.f32.gmra.mxu0 %v609
    %v649 = vpop.f32.mrf.mxu0
    %v650 = vadd.f32 0.0, %v649
    %651 = vmatmul.f32.gmra.mxu0 %v612
    %v652 = vpop.f32.mrf.mxu0
    %v653 = vadd.f32 0.0, %v652
    %654 = vmatmul.f32.gmra.mxu0 %v615
    %v655 = vpop.f32.mrf.mxu0
    %v656 = vadd.f32 0.0, %v655
    %657 = vdwg.mxu0
    %vm658 = vcmp.ne.f32.partialorder %v35, %v35
    %vm659 = vcmp.ne.f32.partialorder %v36, %v36
    %vm660 = vcmp.ne.f32.partialorder %v37, %v37
    %vm661 = vcmp.ne.f32.partialorder %v38, %v38
    %vm662 = vcmp.ne.f32.partialorder %v39, %v39
    %vm663 = vcmp.ne.f32.partialorder %v40, %v40
    %vm664 = vcmp.ne.f32.partialorder %v41, %v41
    %vm665 = vcmp.ne.f32.partialorder %v42, %v42
    %v666 = vsel %vm658, 1, 0
    %v667 = vsel %vm659, 1, 0
    %v668 = vsel %vm660, 1, 0
    %v669 = vsel %vm661, 1, 0
    %v670 = vsel %vm662, 1, 0
    %v671 = vsel %vm663, 1, 0
    %v672 = vsel %vm664, 1, 0
    %v673 = vsel %vm665, 1, 0
    %v674 = vcvt.s32.f32 %v666
    %v675 = vcvt.s32.f32 %v667
    %v676 = vcvt.s32.f32 %v668
    %v677 = vcvt.s32.f32 %v669
    %v678 = vcvt.s32.f32 %v670
    %v679 = vcvt.s32.f32 %v671
    %v680 = vcvt.s32.f32 %v672
    %v681 = vcvt.s32.f32 %v673
    %v682 = vsel %vm47, %v674, -inf
    %683 = vmax.xlane.f32.xlu0 %v682
    %v684 = vpop.xlane.xlu0 %683
    %v685 = vsel %vm47, %v675, -inf
    %686 = vmax.xlane.f32.xlu0 %v685
    %v687 = vpop.xlane.xlu0 %686
    %v688 = vsel %vm47, %v676, -inf
    %689 = vmax.xlane.f32.xlu0 %v688
    %v690 = vpop.xlane.xlu0 %689
    %v691 = vsel %vm47, %v677, -inf
    %692 = vmax.xlane.f32.xlu0 %v691
    %v693 = vpop.xlane.xlu0 %692
    %v694 = vsel %vm47, %v678, -inf
    %695 = vmax.xlane.f32.xlu0 %v694
    %v696 = vpop.xlane.xlu0 %695
    %v697 = vsel %vm47, %v679, -inf
    %698 = vmax.xlane.f32.xlu0 %v697
    %v699 = vpop.xlane.xlu0 %698
    %v700 = vsel %vm47, %v680, -inf
    %701 = vmax.xlane.f32.xlu0 %v700
    %v702 = vpop.xlane.xlu0 %701
    %v703 = vsel %vm47, %v681, -inf
    %704 = vmax.xlane.f32.xlu0 %v703
    %v705 = vpop.xlane.xlu0 %704
    %vm706 = vcmp.gt.f32.partialorder %v684, 0.0
    %vm707 = vcmp.gt.f32.partialorder %v687, 0.0
    %vm708 = vcmp.gt.f32.partialorder %v690, 0.0
    %vm709 = vcmp.gt.f32.partialorder %v693, 0.0
    %vm710 = vcmp.gt.f32.partialorder %v696, 0.0
    %vm711 = vcmp.gt.f32.partialorder %v699, 0.0
    %vm712 = vcmp.gt.f32.partialorder %v702, 0.0
    %vm713 = vcmp.gt.f32.partialorder %v705, 0.0
    %v714 = vsel %vm706, 1, 0
    %v715 = vsel %vm707, 1, 0
    %v716 = vsel %vm708, 1, 0
    %v717 = vsel %vm709, 1, 0
    %v718 = vsel %vm710, 1, 0
    %v719 = vsel %vm711, 1, 0
    %v720 = vsel %vm712, 1, 0
    %v721 = vsel %vm713, 1, 0
    %vm722 = vcmp.eq.s32.totalorder %v714, 1
    %vm723 = vcmp.eq.s32.totalorder %v715, 1
    %vm724 = vcmp.eq.s32.totalorder %v716, 1
    %vm725 = vcmp.eq.s32.totalorder %v717, 1
    %vm726 = vcmp.eq.s32.totalorder %v718, 1
    %vm727 = vcmp.eq.s32.totalorder %v719, 1
    %vm728 = vcmp.eq.s32.totalorder %v720, 1
    %vm729 = vcmp.eq.s32.totalorder %v721, 1
    %v730 = vsel %vm722, 0.0, %v635
    %v731 = vsel %vm723, 0.0, %v638
    %v732 = vsel %vm724, 0.0, %v641
    %v733 = vsel %vm725, 0.0, %v644
    %v734 = vsel %vm726, 0.0, %v647
    %v735 = vsel %vm727, 0.0, %v650
    %v736 = vsel %vm728, 0.0, %v653
    %v737 = vsel %vm729, 0.0, %v656
    %v738 = vld [vmem:[%s4] sm:$0xf]
    %v740 = vsel %vm177, %v328, 0
    %v743 = vsel %vm177, %v343, 0
    %v746 = vsel %vm177, %v358, 0
    %v749 = vsel %vm177, %v373, 0
    %v752 = vsel %vm177, %v388, 0
    %v755 = vsel %vm177, %v403, 0
    %v758 = vsel %vm177, %v418, 0
    %v761 = vsel %vm177, %v433, 0
    %vm763 = vcmask 1043456
    %v765 = vsel %vm763, %v738, 0
    %767 = vmatpush.msra.mxu0 0.0
    %768 = vmatpush.msra.mxu0 0.0
    %769 = vmatpush.msra.mxu0 0.0
    %770 = vmatpush.msra.mxu0 0.0
    %771 = vmatpush.msra.mxu0 0.0
    %772 = vmatpush.msra.mxu0 0.0
    %773 = vmatpush.msra.mxu0 0.0
    %774 = vmatpush.msra.mxu0 0.0
    %775 = vmatpush.msra.mxu0 0.0
    %776 = vmatpush.msra.mxu0 0.0
    %777 = vmatpush.msra.mxu0 0.0
    %778 = vmatpush.msra.mxu0 0.0
    %779 = vmatpush.msra.mxu0 0.0
    %780 = vmatpush.msra.mxu0 0.0
    %781 = vmatpush.msra.mxu0 0.0
    %782 = vmatpush.msra.mxu0 %v765
    %783 = vmatmul.f32.gmra.mxu0 %v740
    %v784 = vpop.f32.mrf.mxu0
    %v785 = vadd.f32 0.0, %v784
    %786 = vmatmul.f32.gmra.mxu0 %v743
    %v787 = vpop.f32.mrf.mxu0
    %v788 = vadd.f32 0.0, %v787
    %789 = vmatmul.f32.gmra.mxu0 %v746
    %v790 = vpop.f32.mrf.mxu0
    %v791 = vadd.f32 0.0, %v790
    %792 = vmatmul.f32.gmra.mxu0 %v749
    %v793 = vpop.f32.mrf.mxu0
    %v794 = vadd.f32 0.0, %v793
    %795 = vmatmul.f32.gmra.mxu0 %v752
    %v796 = vpop.f32.mrf.mxu0
    %v797 = vadd.f32 0.0, %v796
    %798 = vmatmul.f32.gmra.mxu0 %v755
    %v799 = vpop.f32.mrf.mxu0
    %v800 = vadd.f32 0.0, %v799
    %801 = vmatmul.f32.gmra.mxu0 %v758
    %v802 = vpop.f32.mrf.mxu0
    %v803 = vadd.f32 0.0, %v802
    %804 = vmatmul.f32.gmra.mxu0 %v761
    %v805 = vpop.f32.mrf.mxu0
    %v806 = vadd.f32 0.0, %v805
    %807 = vdwg.mxu0
    %v808 = vmul.f32 %v785, %v730
    %v809 = vmul.f32 %v788, %v731
    %v810 = vmul.f32 %v791, %v732
    %v811 = vmul.f32 %v794, %v733
    %v812 = vmul.f32 %v797, %v734
    %v813 = vmul.f32 %v800, %v735
    %v814 = vmul.f32 %v803, %v736
    %v815 = vmul.f32 %v806, %v737
    %v816 = vrot.slane %v808, 4
    %v817 = vadd.f32 %v808, %v816
    %v818 = vrot.slane %v817, 2
    %v819 = vadd.f32 %v817, %v818
    %v820 = vrot.slane %v819, 1
    %v821 = vadd.f32 %v819, %v820
    %v822 = vrot.slane %v809, 4
    %v823 = vadd.f32 %v809, %v822
    %v824 = vrot.slane %v823, 2
    %v825 = vadd.f32 %v823, %v824
    %v826 = vrot.slane %v825, 1
    %v827 = vadd.f32 %v825, %v826
    %v828 = vrot.slane %v810, 4
    %v829 = vadd.f32 %v810, %v828
    %v830 = vrot.slane %v829, 2
    %v831 = vadd.f32 %v829, %v830
    %v832 = vrot.slane %v831, 1
    %v833 = vadd.f32 %v831, %v832
    %v834 = vrot.slane %v811, 4
    %v835 = vadd.f32 %v811, %v834
    %v836 = vrot.slane %v835, 2
    %v837 = vadd.f32 %v835, %v836
    %v838 = vrot.slane %v837, 1
    %v839 = vadd.f32 %v837, %v838
    %v840 = vrot.slane %v812, 4
    %v841 = vadd.f32 %v812, %v840
    %v842 = vrot.slane %v841, 2
    %v843 = vadd.f32 %v841, %v842
    %v844 = vrot.slane %v843, 1
    %v845 = vadd.f32 %v843, %v844
    %v846 = vrot.slane %v813, 4
    %v847 = vadd.f32 %v813, %v846
    %v848 = vrot.slane %v847, 2
    %v849 = vadd.f32 %v847, %v848
    %v850 = vrot.slane %v849, 1
    %v851 = vadd.f32 %v849, %v850
    %v852 = vrot.slane %v814, 4
    %v853 = vadd.f32 %v814, %v852
    %v854 = vrot.slane %v853, 2
    %v855 = vadd.f32 %v853, %v854
    %v856 = vrot.slane %v855, 1
    %v857 = vadd.f32 %v855, %v856
    %v858 = vrot.slane %v815, 4
    %v859 = vadd.f32 %v815, %v858
    %v860 = vrot.slane %v859, 2
    %v861 = vadd.f32 %v859, %v860
    %v862 = vrot.slane %v861, 1
    %v863 = vadd.f32 %v861, %v862
    %v864 = vcvt.s32.f32 %v714
    %v865 = vcvt.s32.f32 %v715
    %v866 = vcvt.s32.f32 %v716
    %v867 = vcvt.s32.f32 %v717
    %v868 = vcvt.s32.f32 %v718
    %v869 = vcvt.s32.f32 %v719
    %v870 = vcvt.s32.f32 %v720
    %v871 = vcvt.s32.f32 %v721
    %v872 = vsub.f32 1.0, %v864
    %v873 = vsub.f32 1.0, %v865
    %v874 = vsub.f32 1.0, %v866
    %v875 = vsub.f32 1.0, %v867
    %v876 = vsub.f32 1.0, %v868
    %v877 = vsub.f32 1.0, %v869
    %v878 = vsub.f32 1.0, %v870
    %v879 = vsub.f32 1.0, %v871
    %v888 = vlaneseq
    %v889 = vand.u32 %v888, 127
    %v890 = vperm.slane %v872, %v889
    %v891 = vperm.slane %v873, %v889
    %v892 = vperm.slane %v874, %v889
    %v893 = vperm.slane %v875, %v889
    %v894 = vperm.slane %v876, %v889
    %v895 = vperm.slane %v877, %v889
    %v896 = vperm.slane %v878, %v889
    %v897 = vperm.slane %v879, %v889
    %vm898 = vcmask 1041409
    %v899 = vsel %vm898, %v891, %v890
    %vm900 = vcmask 1042434
    %v901 = vsel %vm900, %v892, %v899
    %vm902 = vcmask 1043459
    %v903 = vsel %vm902, %v893, %v901
    %vm904 = vcmask 1044484
    %v905 = vsel %vm904, %v894, %v903
    %vm906 = vcmask 1045509
    %v907 = vsel %vm906, %v895, %v905
    %vm908 = vcmask 1046534
    %v909 = vsel %vm908, %v896, %v907
    %vm910 = vcmask 1047559
    %v911 = vsel %vm910, %v897, %v909
    %v913 = vsel %vm576, %v911, 0.0
    %914 = vadd.xlane.f32.xlu0 %v913
    %v915 = vpop.xlane.xlu0 %914
    %v917 = vrot.slane %v915, 1
    %v918 = vrot.slane %v915, 2
    %v919 = vrot.slane %v915, 3
    %v920 = vrot.slane %v915, 4
    %v921 = vrot.slane %v915, 5
    %v922 = vrot.slane %v915, 6
    %v923 = vrot.slane %v915, 7
    %v932 = vrcp.pop %v915
    %v933 = vmul.f32 %v915, %v932
    %v934 = vsub.f32 1.0, %v933
    %v935 = vmul.f32 %v932, %v934
    %v936 = vadd.f32 %v932, %v935
    %vm937 = vweird.f32 %v915
    %vm938 = vweird.f32 %v932
    %vm939 = vmor %vm937, %vm938
    %v940 = vsel %vm939, %v932, %v936
    %v941 = vand.u32 2147483647, %v915
    %vm942 = vcmp.eq.f32.partialorder %v941, 8.507059e+37
    %v943 = vand.u32 %v915, 2147483648
    %v944 = vor.u32 1.1754944e-38, %v943
    %v945 = vsel %vm942, %v944, %v940
    %v946 = vmul.f32 %v821, %v945
    %v947 = vrcp.pop %v917
    %v948 = vmul.f32 %v917, %v947
    %v949 = vsub.f32 1.0, %v948
    %v950 = vmul.f32 %v947, %v949
    %v951 = vadd.f32 %v947, %v950
    %vm952 = vweird.f32 %v917
    %vm953 = vweird.f32 %v947
    %vm954 = vmor %vm952, %vm953
    %v955 = vsel %vm954, %v947, %v951
    %v956 = vand.u32 2147483647, %v917
    %vm957 = vcmp.eq.f32.partialorder %v956, 8.507059e+37
    %v958 = vand.u32 %v917, 2147483648
    %v959 = vor.u32 1.1754944e-38, %v958
    %v960 = vsel %vm957, %v959, %v955
    %v961 = vmul.f32 %v827, %v960
    %v962 = vrcp.pop %v918
    %v963 = vmul.f32 %v918, %v962
    %v964 = vsub.f32 1.0, %v963
    %v965 = vmul.f32 %v962, %v964
    %v966 = vadd.f32 %v962, %v965
    %vm967 = vweird.f32 %v918
    %vm968 = vweird.f32 %v962
    %vm969 = vmor %vm967, %vm968
    %v970 = vsel %vm969, %v962, %v966
    %v971 = vand.u32 2147483647, %v918
    %vm972 = vcmp.eq.f32.partialorder %v971, 8.507059e+37
    %v973 = vand.u32 %v918, 2147483648
    %v974 = vor.u32 1.1754944e-38, %v973
    %v975 = vsel %vm972, %v974, %v970
    %v976 = vmul.f32 %v833, %v975
    %v977 = vrcp.pop %v919
    %v978 = vmul.f32 %v919, %v977
    %v979 = vsub.f32 1.0, %v978
    %v980 = vmul.f32 %v977, %v979
    %v981 = vadd.f32 %v977, %v980
    %vm982 = vweird.f32 %v919
    %vm983 = vweird.f32 %v977
    %vm984 = vmor %vm982, %vm983
    %v985 = vsel %vm984, %v977, %v981
    %v986 = vand.u32 2147483647, %v919
    %vm987 = vcmp.eq.f32.partialorder %v986, 8.507059e+37
    %v988 = vand.u32 %v919, 2147483648
    %v989 = vor.u32 1.1754944e-38, %v988
    %v990 = vsel %vm987, %v989, %v985
    %v991 = vmul.f32 %v839, %v990
    %v992 = vrcp.pop %v920
    %v993 = vmul.f32 %v920, %v992
    %v994 = vsub.f32 1.0, %v993
    %v995 = vmul.f32 %v992, %v994
    %v996 = vadd.f32 %v992, %v995
    %vm997 = vweird.f32 %v920
    %vm998 = vweird.f32 %v992
    %vm999 = vmor %vm997, %vm998
    %v1000 = vsel %vm999, %v992, %v996
    %v1001 = vand.u32 2147483647, %v920
    %vm1002 = vcmp.eq.f32.partialorder %v1001, 8.507059e+37
    %v1003 = vand.u32 %v920, 2147483648
    %v1004 = vor.u32 1.1754944e-38, %v1003
    %v1005 = vsel %vm1002, %v1004, %v1000
    %v1006 = vmul.f32 %v845, %v1005
    %v1007 = vrcp.pop %v921
    %v1008 = vmul.f32 %v921, %v1007
    %v1009 = vsub.f32 1.0, %v1008
    %v1010 = vmul.f32 %v1007, %v1009
    %v1011 = vadd.f32 %v1007, %v1010
    %vm1012 = vweird.f32 %v921
    %vm1013 = vweird.f32 %v1007
    %vm1014 = vmor %vm1012, %vm1013
    %v1015 = vsel %vm1014, %v1007, %v1011
    %v1016 = vand.u32 2147483647, %v921
    %vm1017 = vcmp.eq.f32.partialorder %v1016, 8.507059e+37
    %v1018 = vand.u32 %v921, 2147483648
    %v1019 = vor.u32 1.1754944e-38, %v1018
    %v1020 = vsel %vm1017, %v1019, %v1015
    %v1021 = vmul.f32 %v851, %v1020
    %v1022 = vrcp.pop %v922
    %v1023 = vmul.f32 %v922, %v1022
    %v1024 = vsub.f32 1.0, %v1023
    %v1025 = vmul.f32 %v1022, %v1024
    %v1026 = vadd.f32 %v1022, %v1025
    %vm1027 = vweird.f32 %v922
    %vm1028 = vweird.f32 %v1022
    %vm1029 = vmor %vm1027, %vm1028
    %v1030 = vsel %vm1029, %v1022, %v1026
    %v1031 = vand.u32 2147483647, %v922
    %vm1032 = vcmp.eq.f32.partialorder %v1031, 8.507059e+37
    %v1033 = vand.u32 %v922, 2147483648
    %v1034 = vor.u32 1.1754944e-38, %v1033
    %v1035 = vsel %vm1032, %v1034, %v1030
    %v1036 = vmul.f32 %v857, %v1035
    %v1037 = vrcp.pop %v923
    %v1038 = vmul.f32 %v923, %v1037
    %v1039 = vsub.f32 1.0, %v1038
    %v1040 = vmul.f32 %v1037, %v1039
    %v1041 = vadd.f32 %v1037, %v1040
    %vm1042 = vweird.f32 %v923
    %vm1043 = vweird.f32 %v1037
    %vm1044 = vmor %vm1042, %vm1043
    %v1045 = vsel %vm1044, %v1037, %v1041
    %v1046 = vand.u32 2147483647, %v923
    %vm1047 = vcmp.eq.f32.partialorder %v1046, 8.507059e+37
    %v1048 = vand.u32 %v923, 2147483648
    %v1049 = vor.u32 1.1754944e-38, %v1048
    %v1050 = vsel %vm1047, %v1049, %v1045
    %v1051 = vmul.f32 %v863, %v1050
    %v1052 = vld [vmem:[%s5] sm:$0xff]
    %v1053 = vld [vmem:[%s5 + $0x8] sm:$0xff]
    %v1054 = vld [vmem:[%s5 + $0x10] sm:$0xff]
    %v1055 = vld [vmem:[%s5 + $0x18] sm:$0xff]
    %v1056 = vld [vmem:[%s5 + $0x20] sm:$0xff]
    %v1057 = vld [vmem:[%s5 + $0x28] sm:$0xff]
    %v1058 = vld [vmem:[%s5 + $0x30] sm:$0xff]
    %v1059 = vld [vmem:[%s5 + $0x38] sm:$0xff]
    %v1060 = vld [vmem:[%s5 + $0x40] sm:$0xff]
    %v1061 = vld [vmem:[%s5 + $0x48] sm:$0xff]
    %v1062 = vld [vmem:[%s5 + $0x50] sm:$0xff]
    %v1063 = vld [vmem:[%s5 + $0x58] sm:$0xff]
    %v1064 = vld [vmem:[%s5 + $0x60] sm:$0xff]
    %v1065 = vld [vmem:[%s5 + $0x68] sm:$0xff]
    %v1066 = vld [vmem:[%s5 + $0x70] sm:$0xff]
    %v1067 = vld [vmem:[%s5 + $0x78] sm:$0xff]
    %v1076 = vrot.slane %v961, 7
    %v1077 = vsel %vm898, %v1076, %v946
    %v1078 = vrot.slane %v976, 6
    %v1079 = vsel %vm900, %v1078, %v1077
    %v1080 = vrot.slane %v991, 5
    %v1081 = vsel %vm902, %v1080, %v1079
    %v1082 = vrot.slane %v1006, 4
    %v1083 = vsel %vm904, %v1082, %v1081
    %v1084 = vrot.slane %v1021, 3
    %v1085 = vsel %vm906, %v1084, %v1083
    %v1086 = vrot.slane %v1036, 2
    %v1087 = vsel %vm908, %v1086, %v1085
    %v1088 = vrot.slane %v1051, 1
    %v1089 = vsel %vm910, %v1088, %v1087
    %1091 = vmatpush.msra.mxu0 %v1067
    %1092 = vmatpush.msra.mxu0 %v1066
    %1093 = vmatpush.msra.mxu0 %v1065
    %1094 = vmatpush.msra.mxu0 %v1064
    %1095 = vmatpush.msra.mxu0 %v1063
    %1096 = vmatpush.msra.mxu0 %v1062
    %1097 = vmatpush.msra.mxu0 %v1061
    %1098 = vmatpush.msra.mxu0 %v1060
    %1099 = vmatpush.msra.mxu0 %v1059
    %1100 = vmatpush.msra.mxu0 %v1058
    %1101 = vmatpush.msra.mxu0 %v1057
    %1102 = vmatpush.msra.mxu0 %v1056
    %1103 = vmatpush.msra.mxu0 %v1055
    %1104 = vmatpush.msra.mxu0 %v1054
    %1105 = vmatpush.msra.mxu0 %v1053
    %1106 = vmatpush.msra.mxu0 %v1052
    %1107 = vmatmul.f32.gmra.mxu0 %v1089
    %v1108 = vpop.f32.mrf.mxu0
    %v1109 = vadd.f32 0.0, %v1108
    %1110 = vdwg.mxu0
    %1111 = vst.msk [vmem:[#allocation2] sm:$0xff] %vm580, %v1109
    // Predicated region
    $region26: #{tpu_custom_call.1} parent=1 // pred_check
      _
    $region27: #{tpu_custom_call.1} parent=1 // pred_check_branch
      %1113 = sbr.rel (0) target = $region29
    $region28: #{tpu_custom_call.1} parent=1 // pred_region
      %1115 = vsyncadd [#allocation3], 0
      %s1117 = sshll.u32 [#allocation2], 4
      %s1118 = int_to_ptr.vmem [resolvable:$true] %s1117
      %s1119 = sshll.u32 %s6, 4
      %s1120 = int_to_ptr.hbm [resolvable:$true] %s1119
      %1122 = dma.vmem_to_hbm [thread:$0]  %s1118, 128, %s1120, [#allocation3]
    $region29: #{tpu_custom_call.1} parent=1 // pred_fallthru
      _
    // Predicated region
    $region30: #{tpu_custom_call.1} parent=1 // pred_check
      _
    $region31: #{tpu_custom_call.1} parent=1 // pred_check_branch
      %1124 = sbr.rel (0) target = $region33
    $region32: #{tpu_custom_call.1} parent=1 // pred_region
      %1126 = vsyncadd [#allocation5], 0
      %s1128 = sshll.u32 [#allocation4], 4
      %s1129 = int_to_ptr.vmem [resolvable:$true] %s1128
      %s1130 = sshll.u32 %s7, 4
      %s1131 = int_to_ptr.hbm [resolvable:$true] %s1130
      %1133 = dma.vmem_to_hbm [thread:$0]  %s1129, 128, %s1131, [#allocation5]
    $region33: #{tpu_custom_call.1} parent=1 // pred_fallthru
      _
    // Predicated region
    $region34: #{tpu_custom_call.1} parent=1 // pred_check
      _
    $region35: #{tpu_custom_call.1} parent=1 // pred_check_branch
      %1135 = sbr.rel (0) target = $region37
    $region36: #{tpu_custom_call.1} parent=1 // pred_region
      %1137 = dma.done [#allocation3], 128
    $region37: #{tpu_custom_call.1} parent=1 // pred_fallthru
      _
    // Predicated region
    $region38: #{tpu_custom_call.1} parent=1 // pred_check
      _
    $region39: #{tpu_custom_call.1} parent=1 // pred_check_branch
      %1139 = sbr.rel (0) target = $region41
    $region40: #{tpu_custom_call.1} parent=1 // pred_region
      %1141 = dma.done [#allocation5], 128
    $region41: #{tpu_custom_call.1} parent=1 // pred_fallthru
      _
    %1142 = vsyncpa [#allocation3], 1
    %1143 = vsyncpa [#allocation5], 1

</llo_original>
